<compile_context>
chip_gen: v7x
topology: tpu7x:2x2x1
jax: 0.10.0
libtpu: 0.0.40
codegen_flags: <defaults>
</compile_context>

<pallas_src>
import functools

import jax
import jax.numpy as jnp
from jax.experimental import pallas as pl
from jax.experimental.pallas import tpu as pltpu

EPS = 1e-5


def _bn_relu_kernel(x_ref, gamma_ref, beta_ref, o_ref, *, count):
    # x_ref: (N, tc, HW) -- the full batch and spatial extent for this channel tile,
    # so per-channel statistics are entirely block-local (single fused pass).
    x = x_ref[...].astype(jnp.float32)

    inv_count = 1.0 / count
    s = jnp.sum(x, axis=(0, 2))                         # (tc,)
    ss = jnp.sum(x * x, axis=(0, 2))                    # (tc,)
    mean = (s * inv_count)[:, None]                     # (tc, 1)
    var = (ss * inv_count)[:, None] - mean * mean       # biased batch variance
    var = jnp.maximum(var, 0.0)                         # guard cancellation
    inv_std = jax.lax.rsqrt(var + EPS)

    scale = gamma_ref[...] * inv_std                    # (tc, 1) folded affine
    bias = beta_ref[...] - mean * scale                 # (tc, 1)

    y = x * scale[None, :, :] + bias[None, :, :]        # 1 mul + 1 add / element
    o_ref[...] = jnp.maximum(y, 0.0).astype(o_ref.dtype)


def _default_channel_tile(C):
    """tc=64 on dual-TensorCore chips (v7x) so both cores get work; else tc=128."""
    tc = min(C, 128)
    try:
        kind = jax.devices()[0].device_kind.lower()
        if "v7" in kind:
            tc = min(C, 64)
    except Exception:
        pass
    return tc


def batchnorm_relu(x_nchw, gamma, beta, *, tc=None):
    """Training-mode BatchNorm2d + ReLU.  x_nchw: (N, C, H, W)."""
    N, C, H, W = x_nchw.shape
    HW = H * W
    x = x_nchw.reshape(N, C, HW)                 # zero-copy, NCHW kept end-to-end
    gamma_2d = gamma.reshape(C, 1).astype(jnp.float32)
    beta_2d = beta.reshape(C, 1).astype(jnp.float32)

    if tc is None:
        tc = _default_channel_tile(C)
    assert C % tc == 0 and tc % 8 == 0, "channel tile must be a multiple of 8"

    count = float(N * HW)

    out = pl.pallas_call(
        functools.partial(_bn_relu_kernel, count=count),
        out_shape=jax.ShapeDtypeStruct((N, C, HW), x.dtype),
        grid_spec=pltpu.PrefetchScalarGridSpec(
            num_scalar_prefetch=0,
            grid=(C // tc,),                     # channel-parallel, fully fused
            in_specs=[
                pl.BlockSpec((N, tc, HW), lambda c: (0, c, 0)),
                pl.BlockSpec((tc, 1), lambda c: (c, 0)),
                pl.BlockSpec((tc, 1), lambda c: (c, 0)),
            ],
            out_specs=pl.BlockSpec((N, tc, HW), lambda c: (0, c, 0)),
        ),
        compiler_params=pltpu.CompilerParams(
            dimension_semantics=("parallel",)),
    )(x, gamma_2d, beta_2d)

    return out.reshape(N, C, H, W)


if __name__ == "__main__":
    # Shape implied by the module: x76 = (1, 128, 28, 28), BatchNorm2d(128)
    N, C, H, W = 1, 128, 28, 28
    key = jax.random.PRNGKey(0)
    kx, kg, kb = jax.random.split(key, 3)
    x = jax.random.normal(kx, (N, C, H, W), dtype=jnp.float32)
    # affine params (PyTorch default init is gamma=1, beta=0; randomize slightly
    # to exercise the folded-affine path — semantics are identical)
    gamma = 1.0 + 0.1 * jax.random.normal(kg, (C,), dtype=jnp.float32)
    beta = 0.1 * jax.random.normal(kb, (C,), dtype=jnp.float32)

    out = batchnorm_relu(x, gamma, beta)
    out = jax.block_until_ready(out)

    # pure-JAX reference (training-mode BN: biased batch stats) + ReLU
    mean = jnp.mean(x, axis=(0, 2, 3), keepdims=True)
    var = jnp.mean((x - mean) ** 2, axis=(0, 2, 3), keepdims=True)
    ref = jnp.maximum(
        (x - mean) * jax.lax.rsqrt(var + EPS) * gamma[None, :, None, None]
        + beta[None, :, None, None],
        0.0,
    )
    assert out.shape == (N, C, H, W)
    max_err = float(jnp.max(jnp.abs(out - ref)))
    assert max_err < 1e-4, f"max abs error too large: {max_err}"

    print("KERNEL_OK")
</pallas_src>

<mosaic_0001>
module attributes {stable_mosaic.version = 11 : i64} {
  func.func @_bn_relu_kernel(%arg0: i32, %arg1: memref<1x128x784xf32, #tpu.memory_space<vmem>>, %arg2: memref<128x1xf32, #tpu.memory_space<vmem>>, %arg3: memref<128x1xf32, #tpu.memory_space<vmem>>, %arg4: memref<1x128x784xf32, #tpu.memory_space<vmem>>) attributes {dimension_semantics = [#tpu.dimension_semantics<parallel>], iteration_bounds = array<i64: 1>, scalar_prefetch = 0 : i64, scratch_operands = 0 : i64, tpu.core_type = #tpu.core_type<tc>, window_params = [{transform_indices = @transform_0, window_bounds = array<i64: 1, 128, 784>}, {transform_indices = @transform_1, window_bounds = array<i64: 128, 1>}, {transform_indices = @transform_2, window_bounds = array<i64: 128, 1>}, {transform_indices = @transform_3, window_bounds = array<i64: 1, 128, 784>}]} {
    %c0 = arith.constant 0 : index
    %c0_0 = arith.constant 0 : index
    %c0_1 = arith.constant 0 : index
    %0 = vector.load %arg1[%c0, %c0_0, %c0_1] : memref<1x128x784xf32, #tpu.memory_space<vmem>>, vector<1x128x784xf32>
    %cst = arith.constant dense<0.000000e+00> : vector<128xf32>
    %1 = vector.multi_reduction <add>, %0, %cst [0, 2] : vector<1x128x784xf32> to vector<128xf32>
    %2 = arith.mulf %0, %0 : vector<1x128x784xf32>
    %cst_2 = arith.constant dense<0.000000e+00> : vector<128xf32>
    %3 = vector.multi_reduction <add>, %2, %cst_2 [0, 2] : vector<1x128x784xf32> to vector<128xf32>
    %cst_3 = arith.constant 0.00127551018 : f32
    %4 = vector.broadcast %cst_3 : f32 to vector<128xf32>
    %5 = arith.mulf %1, %4 : vector<128xf32>
    %6 = vector.shape_cast %5 : vector<128xf32> to vector<128x1xf32>
    %cst_4 = arith.constant 0.00127551018 : f32
    %7 = vector.broadcast %cst_4 : f32 to vector<128xf32>
    %8 = arith.mulf %3, %7 : vector<128xf32>
    %9 = vector.shape_cast %8 : vector<128xf32> to vector<128x1xf32>
    %10 = arith.mulf %6, %6 : vector<128x1xf32>
    %11 = arith.subf %9, %10 : vector<128x1xf32>
    %cst_5 = arith.constant 0.000000e+00 : f32
    %12 = vector.broadcast %cst_5 : f32 to vector<128x1xf32>
    %13 = arith.maximumf %11, %12 : vector<128x1xf32>
    %cst_6 = arith.constant 9.99999974E-6 : f32
    %14 = vector.broadcast %cst_6 : f32 to vector<128x1xf32>
    %15 = arith.addf %13, %14 : vector<128x1xf32>
    %16 = math.rsqrt %15 : vector<128x1xf32>
    %c0_7 = arith.constant 0 : index
    %c0_8 = arith.constant 0 : index
    %17 = vector.load %arg2[%c0_7, %c0_8] : memref<128x1xf32, #tpu.memory_space<vmem>>, vector<128x1xf32>
    %18 = arith.mulf %17, %16 : vector<128x1xf32>
    %c0_9 = arith.constant 0 : index
    %c0_10 = arith.constant 0 : index
    %19 = vector.load %arg3[%c0_9, %c0_10] : memref<128x1xf32, #tpu.memory_space<vmem>>, vector<128x1xf32>
    %20 = arith.mulf %6, %18 : vector<128x1xf32>
    %21 = arith.subf %19, %20 : vector<128x1xf32>
    %22 = vector.shape_cast %18 : vector<128x1xf32> to vector<1x128x1xf32>
    %23 = vector.broadcast %22 : vector<1x128x1xf32> to vector<1x128x784xf32>
    %24 = arith.mulf %0, %23 : vector<1x128x784xf32>
    %25 = vector.shape_cast %21 : vector<128x1xf32> to vector<1x128x1xf32>
    %26 = vector.broadcast %25 : vector<1x128x1xf32> to vector<1x128x784xf32>
    %27 = arith.addf %24, %26 : vector<1x128x784xf32>
    %cst_11 = arith.constant 0.000000e+00 : f32
    %28 = vector.broadcast %cst_11 : f32 to vector<1x128x784xf32>
    %29 = arith.maximumf %27, %28 : vector<1x128x784xf32>
    %c0_12 = arith.constant 0 : index
    %c0_13 = arith.constant 0 : index
    %c0_14 = arith.constant 0 : index
    %30 = vector.load %arg4[%c0_12, %c0_13, %c0_14] : memref<1x128x784xf32, #tpu.memory_space<vmem>>, vector<1x128x784xf32>
    tpu.vector_store %arg4[%c0_12, %c0_13, %c0_14], %29 {strides = array<i32>} : memref<1x128x784xf32, #tpu.memory_space<vmem>>, vector<1x128x784xf32>,
    return
  }
  func.func @transform_0(%arg0: i32) -> (i32, i32, i32) {
    %c0_i32 = arith.constant 0 : i32
    %c0_i32_0 = arith.constant 0 : i32
    %c0_i32_1 = arith.constant 0 : i32
    return %c0_i32, %arg0, %c0_i32_0 : i32, i32, i32
  }
  func.func @transform_1(%arg0: i32) -> (i32, i32) {
    %c0_i32 = arith.constant 0 : i32
    %c0_i32_0 = arith.constant 0 : i32
    return %arg0, %c0_i32 : i32, i32
  }
  func.func @transform_2(%arg0: i32) -> (i32, i32) {
    %c0_i32 = arith.constant 0 : i32
    %c0_i32_0 = arith.constant 0 : i32
    return %arg0, %c0_i32 : i32, i32
  }
  func.func @transform_3(%arg0: i32) -> (i32, i32, i32) {
    %c0_i32 = arith.constant 0 : i32
    %c0_i32_0 = arith.constant 0 : i32
    %c0_i32_1 = arith.constant 0 : i32
    return %c0_i32, %arg0, %c0_i32_0 : i32, i32, i32
  }
}

</mosaic_0001>

<llo_original>
// kernel: tpu_custom_call.1
$region0: #{tpu_custom_call.1}
  #allocation0 [shape = 'u32[]', space=smem, size = 0x4, offset = 0x4, fixed_abs, tag = 'smem constant byte address 0x4 - core index']
  #allocation1 [shape = 'u32[144,128]{1,0:T(1,128)}', space=vmem, size = 0x12000, scoped, tag = 'internal scratch']
  %s0 = inlined_call_operand.vmem [shape: f32[1,128,784], index: 0, kind: input, shape index: {}]
  %s1 = inlined_call_operand.vmem [shape: f32[128,1], index: 1, kind: input, shape index: {}]
  %s2 = inlined_call_operand.vmem [shape: f32[128,1], index: 2, kind: input, shape index: {}]
  %s3 = inlined_call_operand.vmem [shape: f32[1,128,784], index: 3, kind: output, shape index: {}]
  %s4 = sld [smem:[#allocation0]]
  $region22: #{tpu_custom_call.1} parent=0
    _
  %s6 = ssub.s32 1, %s4
  %s7 = scalar_select 0, %s6, %s4
  // Predicated region
  $region2: #{tpu_custom_call.1} parent=0 // pred_check
    _
  $region3: #{tpu_custom_call.1} parent=0 // pred_check_branch
    %9 = sbr.rel (0) target = $region5
  $region4: #{tpu_custom_call.1} parent=0 // pred_region
    _
  $region5: #{tpu_custom_call.1} parent=0 // pred_fallthru
    _
  // Predicated region
  $region6: #{tpu_custom_call.1} parent=0 // pred_check
    _
  $region7: #{tpu_custom_call.1} parent=0 // pred_check_branch
    %11 = sbr.rel (0) target = $region9
  $region8: #{tpu_custom_call.1} parent=0 // pred_region
    _
  $region9: #{tpu_custom_call.1} parent=0 // pred_fallthru
    _
  // Predicated region
  $region10: #{tpu_custom_call.1} parent=0 // pred_check
    _
  $region11: #{tpu_custom_call.1} parent=0 // pred_check_branch
    %13 = sbr.rel (0) target = $region13
  $region12: #{tpu_custom_call.1} parent=0 // pred_region
    _
  $region13: #{tpu_custom_call.1} parent=0 // pred_fallthru
    _
  %v14 = vld [vmem:[%s0] sm:$0xff]
  %v15 = vld [vmem:[%s0 + $0x8] sm:$0xff]
  %v16 = vld [vmem:[%s0 + $0x10] sm:$0xff]
  %v17 = vld [vmem:[%s0 + $0x18] sm:$0xff]
  %v18 = vld [vmem:[%s0 + $0x20] sm:$0xff]
  %v19 = vld [vmem:[%s0 + $0x28] sm:$0xff]
  %v20 = vld [vmem:[%s0 + $0x30] sm:$0xff]
  %v21 = vld [vmem:[%s0 + $0x38] sm:$0xff]
  %v22 = vld [vmem:[%s0 + $0x40] sm:$0xff]
  %v23 = vld [vmem:[%s0 + $0x48] sm:$0xff]
  %v24 = vld [vmem:[%s0 + $0x50] sm:$0xff]
  %v25 = vld [vmem:[%s0 + $0x58] sm:$0xff]
  %v26 = vld [vmem:[%s0 + $0x60] sm:$0xff]
  %v27 = vld [vmem:[%s0 + $0x68] sm:$0xff]
  %v28 = vld [vmem:[%s0 + $0x70] sm:$0xff]
  %v29 = vld [vmem:[%s0 + $0x78] sm:$0xff]
  %v30 = vld [vmem:[%s0 + $0x80] sm:$0xff]
  %v31 = vld [vmem:[%s0 + $0x88] sm:$0xff]
  %v32 = vld [vmem:[%s0 + $0x90] sm:$0xff]
  %v33 = vld [vmem:[%s0 + $0x98] sm:$0xff]
  %v34 = vld [vmem:[%s0 + $0xa0] sm:$0xff]
  %v35 = vld [vmem:[%s0 + $0xa8] sm:$0xff]
  %v36 = vld [vmem:[%s0 + $0xb0] sm:$0xff]
  %v37 = vld [vmem:[%s0 + $0xb8] sm:$0xff]
  %v38 = vld [vmem:[%s0 + $0xc0] sm:$0xff]
  %v39 = vld [vmem:[%s0 + $0xc8] sm:$0xff]
  %v40 = vld [vmem:[%s0 + $0xd0] sm:$0xff]
  %v41 = vld [vmem:[%s0 + $0xd8] sm:$0xff]
  %v42 = vld [vmem:[%s0 + $0xe0] sm:$0xff]
  %v43 = vld [vmem:[%s0 + $0xe8] sm:$0xff]
  %v44 = vld [vmem:[%s0 + $0xf0] sm:$0xff]
  %v45 = vld [vmem:[%s0 + $0xf8] sm:$0xff]
  %v46 = vld [vmem:[%s0 + $0x100] sm:$0xff]
  %v47 = vld [vmem:[%s0 + $0x108] sm:$0xff]
  %v48 = vld [vmem:[%s0 + $0x110] sm:$0xff]
  %v49 = vld [vmem:[%s0 + $0x118] sm:$0xff]
  %v50 = vld [vmem:[%s0 + $0x120] sm:$0xff]
  %v51 = vld [vmem:[%s0 + $0x128] sm:$0xff]
  %v52 = vld [vmem:[%s0 + $0x130] sm:$0xff]
  %v53 = vld [vmem:[%s0 + $0x138] sm:$0xff]
  %v54 = vld [vmem:[%s0 + $0x140] sm:$0xff]
  %v55 = vld [vmem:[%s0 + $0x148] sm:$0xff]
  %v56 = vld [vmem:[%s0 + $0x150] sm:$0xff]
  %v57 = vld [vmem:[%s0 + $0x158] sm:$0xff]
  %v58 = vld [vmem:[%s0 + $0x160] sm:$0xff]
  %v59 = vld [vmem:[%s0 + $0x168] sm:$0xff]
  %v60 = vld [vmem:[%s0 + $0x170] sm:$0xff]
  %v61 = vld [vmem:[%s0 + $0x178] sm:$0xff]
  %v62 = vld [vmem:[%s0 + $0x180] sm:$0xff]
  %v63 = vld [vmem:[%s0 + $0x188] sm:$0xff]
  %v64 = vld [vmem:[%s0 + $0x190] sm:$0xff]
  %v65 = vld [vmem:[%s0 + $0x198] sm:$0xff]
  %v66 = vld [vmem:[%s0 + $0x1a0] sm:$0xff]
  %v67 = vld [vmem:[%s0 + $0x1a8] sm:$0xff]
  %v68 = vld [vmem:[%s0 + $0x1b0] sm:$0xff]
  %v69 = vld [vmem:[%s0 + $0x1b8] sm:$0xff]
  %v70 = vld [vmem:[%s0 + $0x1c0] sm:$0xff]
  %v71 = vld [vmem:[%s0 + $0x1c8] sm:$0xff]
  %v72 = vld [vmem:[%s0 + $0x1d0] sm:$0xff]
  %v73 = vld [vmem:[%s0 + $0x1d8] sm:$0xff]
  %v74 = vld [vmem:[%s0 + $0x1e0] sm:$0xff]
  %v75 = vld [vmem:[%s0 + $0x1e8] sm:$0xff]
  %v76 = vld [vmem:[%s0 + $0x1f0] sm:$0xff]
  %v77 = vld [vmem:[%s0 + $0x1f8] sm:$0xff]
  %v78 = vld [vmem:[%s0 + $0x200] sm:$0xff]
  %v79 = vld [vmem:[%s0 + $0x208] sm:$0xff]
  %v80 = vld [vmem:[%s0 + $0x210] sm:$0xff]
  %v81 = vld [vmem:[%s0 + $0x218] sm:$0xff]
  %v82 = vld [vmem:[%s0 + $0x220] sm:$0xff]
  %v83 = vld [vmem:[%s0 + $0x228] sm:$0xff]
  %v84 = vld [vmem:[%s0 + $0x230] sm:$0xff]
  %v85 = vld [vmem:[%s0 + $0x238] sm:$0xff]
  %v86 = vld [vmem:[%s0 + $0x240] sm:$0xff]
  %v87 = vld [vmem:[%s0 + $0x248] sm:$0xff]
  %v88 = vld [vmem:[%s0 + $0x250] sm:$0xff]
  %v89 = vld [vmem:[%s0 + $0x258] sm:$0xff]
  %v90 = vld [vmem:[%s0 + $0x260] sm:$0xff]
  %v91 = vld [vmem:[%s0 + $0x268] sm:$0xff]
  %v92 = vld [vmem:[%s0 + $0x270] sm:$0xff]
  %v93 = vld [vmem:[%s0 + $0x278] sm:$0xff]
  %v94 = vld [vmem:[%s0 + $0x280] sm:$0xff]
  %v95 = vld [vmem:[%s0 + $0x288] sm:$0xff]
  %v96 = vld [vmem:[%s0 + $0x290] sm:$0xff]
  %v97 = vld [vmem:[%s0 + $0x298] sm:$0xff]
  %v98 = vld [vmem:[%s0 + $0x2a0] sm:$0xff]
  %v99 = vld [vmem:[%s0 + $0x2a8] sm:$0xff]
  %v100 = vld [vmem:[%s0 + $0x2b0] sm:$0xff]
  %v101 = vld [vmem:[%s0 + $0x2b8] sm:$0xff]
  %v102 = vld [vmem:[%s0 + $0x2c0] sm:$0xff]
  %v103 = vld [vmem:[%s0 + $0x2c8] sm:$0xff]
  %v104 = vld [vmem:[%s0 + $0x2d0] sm:$0xff]
  %v105 = vld [vmem:[%s0 + $0x2d8] sm:$0xff]
  %v106 = vld [vmem:[%s0 + $0x2e0] sm:$0xff]
  %v107 = vld [vmem:[%s0 + $0x2e8] sm:$0xff]
  %v108 = vld [vmem:[%s0 + $0x2f0] sm:$0xff]
  %v109 = vld [vmem:[%s0 + $0x2f8] sm:$0xff]
  %v110 = vld [vmem:[%s0 + $0x300] sm:$0xff]
  %v111 = vld [vmem:[%s0 + $0x308] sm:$0xff]
  %v112 = vld [vmem:[%s0 + $0x310] sm:$0xff]
  %v113 = vld [vmem:[%s0 + $0x318] sm:$0xff]
  %v114 = vld [vmem:[%s0 + $0x320] sm:$0xff]
  %v115 = vld [vmem:[%s0 + $0x328] sm:$0xff]
  %v116 = vld [vmem:[%s0 + $0x330] sm:$0xff]
  %v117 = vld [vmem:[%s0 + $0x338] sm:$0xff]
  %v118 = vld [vmem:[%s0 + $0x340] sm:$0xff]
  %v119 = vld [vmem:[%s0 + $0x348] sm:$0xff]
  %v120 = vld [vmem:[%s0 + $0x350] sm:$0xff]
  %v121 = vld [vmem:[%s0 + $0x358] sm:$0xff]
  %v122 = vld [vmem:[%s0 + $0x360] sm:$0xff]
  %v123 = vld [vmem:[%s0 + $0x368] sm:$0xff]
  %v124 = vld [vmem:[%s0 + $0x370] sm:$0xff]
  %v125 = vld [vmem:[%s0 + $0x378] sm:$0xff]
  %v126 = vadd.f32 %v14, %v15
  %v127 = vadd.f32 %v126, %v16
  %v128 = vadd.f32 %v127, %v17
  %v129 = vadd.f32 %v128, %v18
  %v130 = vadd.f32 %v129, %v19
  %vm131 = vcmask 130048
  %v132 = vsel %vm131, %v20, 0.0
  %v133 = vadd.f32 %v130, %v132
  %134 = vadd.xlane.f32.xlu0 %v133
  %v135 = vpop.xlane.xlu0 %134
  %v136 = vadd.f32 %v21, %v22
  %v137 = vadd.f32 %v136, %v23
  %v138 = vadd.f32 %v137, %v24
  %v139 = vadd.f32 %v138, %v25
  %v140 = vadd.f32 %v139, %v26
  %v141 = vsel %vm131, %v27, 0.0
  %v142 = vadd.f32 %v140, %v141
  %143 = vadd.xlane.f32.xlu0 %v142
  %v144 = vpop.xlane.xlu0 %143
  %v145 = vadd.f32 %v28, %v29
  %v146 = vadd.f32 %v145, %v30
  %v147 = vadd.f32 %v146, %v31
  %v148 = vadd.f32 %v147, %v32
  %v149 = vadd.f32 %v148, %v33
  %v150 = vsel %vm131, %v34, 0.0
  %v151 = vadd.f32 %v149, %v150
  %152 = vadd.xlane.f32.xlu0 %v151
  %v153 = vpop.xlane.xlu0 %152
  %v154 = vadd.f32 %v35, %v36
  %v155 = vadd.f32 %v154, %v37
  %v156 = vadd.f32 %v155, %v38
  %v157 = vadd.f32 %v156, %v39
  %v158 = vadd.f32 %v157, %v40
  %v159 = vsel %vm131, %v41, 0.0
  %v160 = vadd.f32 %v158, %v159
  %161 = vadd.xlane.f32.xlu0 %v160
  %v162 = vpop.xlane.xlu0 %161
  %v163 = vadd.f32 %v42, %v43
  %v164 = vadd.f32 %v163, %v44
  %v165 = vadd.f32 %v164, %v45
  %v166 = vadd.f32 %v165, %v46
  %v167 = vadd.f32 %v166, %v47
  %v168 = vsel %vm131, %v48, 0.0
  %v169 = vadd.f32 %v167, %v168
  %170 = vadd.xlane.f32.xlu0 %v169
  %v171 = vpop.xlane.xlu0 %170
  %v172 = vadd.f32 %v49, %v50
  %v173 = vadd.f32 %v172, %v51
  %v174 = vadd.f32 %v173, %v52
  %v175 = vadd.f32 %v174, %v53
  %v176 = vadd.f32 %v175, %v54
  %v177 = vsel %vm131, %v55, 0.0
  %v178 = vadd.f32 %v176, %v177
  %179 = vadd.xlane.f32.xlu0 %v178
  %v180 = vpop.xlane.xlu0 %179
  %v181 = vadd.f32 %v56, %v57
  %v182 = vadd.f32 %v181, %v58
  %v183 = vadd.f32 %v182, %v59
  %v184 = vadd.f32 %v183, %v60
  %v185 = vadd.f32 %v184, %v61
  %v186 = vsel %vm131, %v62, 0.0
  %v187 = vadd.f32 %v185, %v186
  %188 = vadd.xlane.f32.xlu0 %v187
  %v189 = vpop.xlane.xlu0 %188
  %v190 = vadd.f32 %v63, %v64
  %v191 = vadd.f32 %v190, %v65
  %v192 = vadd.f32 %v191, %v66
  %v193 = vadd.f32 %v192, %v67
  %v194 = vadd.f32 %v193, %v68
  %v195 = vsel %vm131, %v69, 0.0
  %v196 = vadd.f32 %v194, %v195
  %197 = vadd.xlane.f32.xlu0 %v196
  %v198 = vpop.xlane.xlu0 %197
  %v199 = vadd.f32 %v70, %v71
  %v200 = vadd.f32 %v199, %v72
  %v201 = vadd.f32 %v200, %v73
  %v202 = vadd.f32 %v201, %v74
  %v203 = vadd.f32 %v202, %v75
  %v204 = vsel %vm131, %v76, 0.0
  %v205 = vadd.f32 %v203, %v204
  %206 = vadd.xlane.f32.xlu0 %v205
  %v207 = vpop.xlane.xlu0 %206
  %v208 = vadd.f32 %v77, %v78
  %v209 = vadd.f32 %v208, %v79
  %v210 = vadd.f32 %v209, %v80
  %v211 = vadd.f32 %v210, %v81
  %v212 = vadd.f32 %v211, %v82
  %v213 = vsel %vm131, %v83, 0.0
  %v214 = vadd.f32 %v212, %v213
  %215 = vadd.xlane.f32.xlu0 %v214
  %v216 = vpop.xlane.xlu0 %215
  %v217 = vadd.f32 %v84, %v85
  %v218 = vadd.f32 %v217, %v86
  %v219 = vadd.f32 %v218, %v87
  %v220 = vadd.f32 %v219, %v88
  %v221 = vadd.f32 %v220, %v89
  %v222 = vsel %vm131, %v90, 0.0
  %v223 = vadd.f32 %v221, %v222
  %224 = vadd.xlane.f32.xlu0 %v223
  %v225 = vpop.xlane.xlu0 %224
  %v226 = vadd.f32 %v91, %v92
  %v227 = vadd.f32 %v226, %v93
  %v228 = vadd.f32 %v227, %v94
  %v229 = vadd.f32 %v228, %v95
  %v230 = vadd.f32 %v229, %v96
  %v231 = vsel %vm131, %v97, 0.0
  %v232 = vadd.f32 %v230, %v231
  %233 = vadd.xlane.f32.xlu0 %v232
  %v234 = vpop.xlane.xlu0 %233
  %v235 = vadd.f32 %v98, %v99
  %v236 = vadd.f32 %v235, %v100
  %v237 = vadd.f32 %v236, %v101
  %v238 = vadd.f32 %v237, %v102
  %v239 = vadd.f32 %v238, %v103
  %v240 = vsel %vm131, %v104, 0.0
  %v241 = vadd.f32 %v239, %v240
  %242 = vadd.xlane.f32.xlu0 %v241
  %v243 = vpop.xlane.xlu0 %242
  %v244 = vadd.f32 %v105, %v106
  %v245 = vadd.f32 %v244, %v107
  %v246 = vadd.f32 %v245, %v108
  %v247 = vadd.f32 %v246, %v109
  %v248 = vadd.f32 %v247, %v110
  %v249 = vsel %vm131, %v111, 0.0
  %v250 = vadd.f32 %v248, %v249
  %251 = vadd.xlane.f32.xlu0 %v250
  %v252 = vpop.xlane.xlu0 %251
  %v253 = vadd.f32 %v112, %v113
  %v254 = vadd.f32 %v253, %v114
  %v255 = vadd.f32 %v254, %v115
  %v256 = vadd.f32 %v255, %v116
  %v257 = vadd.f32 %v256, %v117
  %v258 = vsel %vm131, %v118, 0.0
  %v259 = vadd.f32 %v257, %v258
  %260 = vadd.xlane.f32.xlu0 %v259
  %v261 = vpop.xlane.xlu0 %260
  %v262 = vadd.f32 %v119, %v120
  %v263 = vadd.f32 %v262, %v121
  %v264 = vadd.f32 %v263, %v122
  %v265 = vadd.f32 %v264, %v123
  %v266 = vadd.f32 %v265, %v124
  %v267 = vsel %vm131, %v125, 0.0
  %v268 = vadd.f32 %v266, %v267
  %269 = vadd.xlane.f32.xlu0 %v268
  %v270 = vpop.xlane.xlu0 %269
  %v271 = vmul.f32 %v14, %v14
  %v272 = vmul.f32 %v15, %v15
  %v273 = vmul.f32 %v16, %v16
  %v274 = vmul.f32 %v17, %v17
  %v275 = vmul.f32 %v18, %v18
  %v276 = vmul.f32 %v19, %v19
  %v277 = vmul.f32 %v20, %v20
  %v278 = vmul.f32 %v21, %v21
  %v279 = vmul.f32 %v22, %v22
  %v280 = vmul.f32 %v23, %v23
  %v281 = vmul.f32 %v24, %v24
  %v282 = vmul.f32 %v25, %v25
  %v283 = vmul.f32 %v26, %v26
  %v284 = vmul.f32 %v27, %v27
  %v285 = vmul.f32 %v28, %v28
  %v286 = vmul.f32 %v29, %v29
  %v287 = vmul.f32 %v30, %v30
  %v288 = vmul.f32 %v31, %v31
  %v289 = vmul.f32 %v32, %v32
  %v290 = vmul.f32 %v33, %v33
  %v291 = vmul.f32 %v34, %v34
  %v292 = vmul.f32 %v35, %v35
  %v293 = vmul.f32 %v36, %v36
  %v294 = vmul.f32 %v37, %v37
  %v295 = vmul.f32 %v38, %v38
  %v296 = vmul.f32 %v39, %v39
  %v297 = vmul.f32 %v40, %v40
  %v298 = vmul.f32 %v41, %v41
  %v299 = vmul.f32 %v42, %v42
  %v300 = vmul.f32 %v43, %v43
  %v301 = vmul.f32 %v44, %v44
  %v302 = vmul.f32 %v45, %v45
  %v303 = vmul.f32 %v46, %v46
  %v304 = vmul.f32 %v47, %v47
  %v305 = vmul.f32 %v48, %v48
  %v306 = vmul.f32 %v49, %v49
  %v307 = vmul.f32 %v50, %v50
  %v308 = vmul.f32 %v51, %v51
  %v309 = vmul.f32 %v52, %v52
  %v310 = vmul.f32 %v53, %v53
  %v311 = vmul.f32 %v54, %v54
  %v312 = vmul.f32 %v55, %v55
  %v313 = vmul.f32 %v56, %v56
  %v314 = vmul.f32 %v57, %v57
  %v315 = vmul.f32 %v58, %v58
  %v316 = vmul.f32 %v59, %v59
  %v317 = vmul.f32 %v60, %v60
  %v318 = vmul.f32 %v61, %v61
  %v319 = vmul.f32 %v62, %v62
  %v320 = vmul.f32 %v63, %v63
  %v321 = vmul.f32 %v64, %v64
  %v322 = vmul.f32 %v65, %v65
  %v323 = vmul.f32 %v66, %v66
  %v324 = vmul.f32 %v67, %v67
  %v325 = vmul.f32 %v68, %v68
  %v326 = vmul.f32 %v69, %v69
  %v327 = vmul.f32 %v70, %v70
  %v328 = vmul.f32 %v71, %v71
  %v329 = vmul.f32 %v72, %v72
  %v330 = vmul.f32 %v73, %v73
  %v331 = vmul.f32 %v74, %v74
  %v332 = vmul.f32 %v75, %v75
  %v333 = vmul.f32 %v76, %v76
  %v334 = vmul.f32 %v77, %v77
  %v335 = vmul.f32 %v78, %v78
  %v336 = vmul.f32 %v79, %v79
  %v337 = vmul.f32 %v80, %v80
  %v338 = vmul.f32 %v81, %v81
  %v339 = vmul.f32 %v82, %v82
  %v340 = vmul.f32 %v83, %v83
  %v341 = vmul.f32 %v84, %v84
  %v342 = vmul.f32 %v85, %v85
  %v343 = vmul.f32 %v86, %v86
  %v344 = vmul.f32 %v87, %v87
  %v345 = vmul.f32 %v88, %v88
  %v346 = vmul.f32 %v89, %v89
  %v347 = vmul.f32 %v90, %v90
  %v348 = vmul.f32 %v91, %v91
  %v349 = vmul.f32 %v92, %v92
  %v350 = vmul.f32 %v93, %v93
  %v351 = vmul.f32 %v94, %v94
  %v352 = vmul.f32 %v95, %v95
  %v353 = vmul.f32 %v96, %v96
  %v354 = vmul.f32 %v97, %v97
  %v355 = vmul.f32 %v98, %v98
  %v356 = vmul.f32 %v99, %v99
  %v357 = vmul.f32 %v100, %v100
  %v358 = vmul.f32 %v101, %v101
  %v359 = vmul.f32 %v102, %v102
  %v360 = vmul.f32 %v103, %v103
  %v361 = vmul.f32 %v104, %v104
  %v362 = vmul.f32 %v105, %v105
  %v363 = vmul.f32 %v106, %v106
  %v364 = vmul.f32 %v107, %v107
  %v365 = vmul.f32 %v108, %v108
  %v366 = vmul.f32 %v109, %v109
  %v367 = vmul.f32 %v110, %v110
  %v368 = vmul.f32 %v111, %v111
  %v369 = vmul.f32 %v112, %v112
  %v370 = vmul.f32 %v113, %v113
  %v371 = vmul.f32 %v114, %v114
  %v372 = vmul.f32 %v115, %v115
  %v373 = vmul.f32 %v116, %v116
  %v374 = vmul.f32 %v117, %v117
  %v375 = vmul.f32 %v118, %v118
  %v376 = vmul.f32 %v119, %v119
  %v377 = vmul.f32 %v120, %v120
  %v378 = vmul.f32 %v121, %v121
  %v379 = vmul.f32 %v122, %v122
  %v380 = vmul.f32 %v123, %v123
  %v381 = vmul.f32 %v124, %v124
  %v382 = vmul.f32 %v125, %v125
  %v383 = vadd.f32 %v271, %v272
  %v384 = vadd.f32 %v383, %v273
  %v385 = vadd.f32 %v384, %v274
  %v386 = vadd.f32 %v385, %v275
  %v387 = vadd.f32 %v386, %v276
  %v388 = vsel %vm131, %v277, 0.0
  %v389 = vadd.f32 %v387, %v388
  %390 = vadd.xlane.f32.xlu0 %v389
  %v391 = vpop.xlane.xlu0 %390
  %v392 = vadd.f32 %v278, %v279
  %v393 = vadd.f32 %v392, %v280
  %v394 = vadd.f32 %v393, %v281
  %v395 = vadd.f32 %v394, %v282
  %v396 = vadd.f32 %v395, %v283
  %v397 = vsel %vm131, %v284, 0.0
  %v398 = vadd.f32 %v396, %v397
  %399 = vadd.xlane.f32.xlu0 %v398
  %v400 = vpop.xlane.xlu0 %399
  %v401 = vadd.f32 %v285, %v286
  %v402 = vadd.f32 %v401, %v287
  %v403 = vadd.f32 %v402, %v288
  %v404 = vadd.f32 %v403, %v289
  %v405 = vadd.f32 %v404, %v290
  %v406 = vsel %vm131, %v291, 0.0
  %v407 = vadd.f32 %v405, %v406
  %408 = vadd.xlane.f32.xlu0 %v407
  %v409 = vpop.xlane.xlu0 %408
  %v410 = vadd.f32 %v292, %v293
  %v411 = vadd.f32 %v410, %v294
  %v412 = vadd.f32 %v411, %v295
  %v413 = vadd.f32 %v412, %v296
  %v414 = vadd.f32 %v413, %v297
  %v415 = vsel %vm131, %v298, 0.0
  %v416 = vadd.f32 %v414, %v415
  %417 = vadd.xlane.f32.xlu0 %v416
  %v418 = vpop.xlane.xlu0 %417
  %v419 = vadd.f32 %v299, %v300
  %v420 = vadd.f32 %v419, %v301
  %v421 = vadd.f32 %v420, %v302
  %v422 = vadd.f32 %v421, %v303
  %v423 = vadd.f32 %v422, %v304
  %v424 = vsel %vm131, %v305, 0.0
  %v425 = vadd.f32 %v423, %v424
  %426 = vadd.xlane.f32.xlu0 %v425
  %v427 = vpop.xlane.xlu0 %426
  %v428 = vadd.f32 %v306, %v307
  %v429 = vadd.f32 %v428, %v308
  %v430 = vadd.f32 %v429, %v309
  %v431 = vadd.f32 %v430, %v310
  %v432 = vadd.f32 %v431, %v311
  %v433 = vsel %vm131, %v312, 0.0
  %v434 = vadd.f32 %v432, %v433
  %435 = vadd.xlane.f32.xlu0 %v434
  %v436 = vpop.xlane.xlu0 %435
  %v437 = vadd.f32 %v313, %v314
  %v438 = vadd.f32 %v437, %v315
  %v439 = vadd.f32 %v438, %v316
  %v440 = vadd.f32 %v439, %v317
  %v441 = vadd.f32 %v440, %v318
  %v442 = vsel %vm131, %v319, 0.0
  %v443 = vadd.f32 %v441, %v442
  %444 = vadd.xlane.f32.xlu0 %v443
  %v445 = vpop.xlane.xlu0 %444
  %v446 = vadd.f32 %v320, %v321
  %v447 = vadd.f32 %v446, %v322
  %v448 = vadd.f32 %v447, %v323
  %v449 = vadd.f32 %v448, %v324
  %v450 = vadd.f32 %v449, %v325
  %v451 = vsel %vm131, %v326, 0.0
  %v452 = vadd.f32 %v450, %v451
  %453 = vadd.xlane.f32.xlu0 %v452
  %v454 = vpop.xlane.xlu0 %453
  %v455 = vadd.f32 %v327, %v328
  %v456 = vadd.f32 %v455, %v329
  %v457 = vadd.f32 %v456, %v330
  %v458 = vadd.f32 %v457, %v331
  %v459 = vadd.f32 %v458, %v332
  %v460 = vsel %vm131, %v333, 0.0
  %v461 = vadd.f32 %v459, %v460
  %462 = vadd.xlane.f32.xlu0 %v461
  %v463 = vpop.xlane.xlu0 %462
  %v464 = vadd.f32 %v334, %v335
  %v465 = vadd.f32 %v464, %v336
  %v466 = vadd.f32 %v465, %v337
  %v467 = vadd.f32 %v466, %v338
  %v468 = vadd.f32 %v467, %v339
  %v469 = vsel %vm131, %v340, 0.0
  %v470 = vadd.f32 %v468, %v469
  %471 = vadd.xlane.f32.xlu0 %v470
  %v472 = vpop.xlane.xlu0 %471
  %v473 = vadd.f32 %v341, %v342
  %v474 = vadd.f32 %v473, %v343
  %v475 = vadd.f32 %v474, %v344
  %v476 = vadd.f32 %v475, %v345
  %v477 = vadd.f32 %v476, %v346
  %v478 = vsel %vm131, %v347, 0.0
  %v479 = vadd.f32 %v477, %v478
  %480 = vadd.xlane.f32.xlu0 %v479
  %v481 = vpop.xlane.xlu0 %480
  %v482 = vadd.f32 %v348, %v349
  %v483 = vadd.f32 %v482, %v350
  %v484 = vadd.f32 %v483, %v351
  %v485 = vadd.f32 %v484, %v352
  %v486 = vadd.f32 %v485, %v353
  %v487 = vsel %vm131, %v354, 0.0
  %v488 = vadd.f32 %v486, %v487
  %489 = vadd.xlane.f32.xlu0 %v488
  %v490 = vpop.xlane.xlu0 %489
  %v491 = vadd.f32 %v355, %v356
  %v492 = vadd.f32 %v491, %v357
  %v493 = vadd.f32 %v492, %v358
  %v494 = vadd.f32 %v493, %v359
  %v495 = vadd.f32 %v494, %v360
  %v496 = vsel %vm131, %v361, 0.0
  %v497 = vadd.f32 %v495, %v496
  %498 = vadd.xlane.f32.xlu0 %v497
  %v499 = vpop.xlane.xlu0 %498
  %v500 = vadd.f32 %v362, %v363
  %v501 = vadd.f32 %v500, %v364
  %v502 = vadd.f32 %v501, %v365
  %v503 = vadd.f32 %v502, %v366
  %v504 = vadd.f32 %v503, %v367
  %v505 = vsel %vm131, %v368, 0.0
  %v506 = vadd.f32 %v504, %v505
  %507 = vadd.xlane.f32.xlu0 %v506
  %v508 = vpop.xlane.xlu0 %507
  %v509 = vadd.f32 %v369, %v370
  %v510 = vadd.f32 %v509, %v371
  %v511 = vadd.f32 %v510, %v372
  %v512 = vadd.f32 %v511, %v373
  %v513 = vadd.f32 %v512, %v374
  %v514 = vsel %vm131, %v375, 0.0
  %v515 = vadd.f32 %v513, %v514
  %516 = vadd.xlane.f32.xlu0 %v515
  %v517 = vpop.xlane.xlu0 %516
  %v518 = vadd.f32 %v376, %v377
  %v519 = vadd.f32 %v518, %v378
  %v520 = vadd.f32 %v519, %v379
  %v521 = vadd.f32 %v520, %v380
  %v522 = vadd.f32 %v521, %v381
  %v523 = vsel %vm131, %v382, 0.0
  %v524 = vadd.f32 %v522, %v523
  %525 = vadd.xlane.f32.xlu0 %v524
  %v526 = vpop.xlane.xlu0 %525
  %v527 = vmul.f32 %v135, 0.0012755102
  %v528 = vmul.f32 %v144, 0.0012755102
  %v529 = vmul.f32 %v153, 0.0012755102
  %v530 = vmul.f32 %v162, 0.0012755102
  %v531 = vmul.f32 %v171, 0.0012755102
  %v532 = vmul.f32 %v180, 0.0012755102
  %v533 = vmul.f32 %v189, 0.0012755102
  %v534 = vmul.f32 %v198, 0.0012755102
  %v535 = vmul.f32 %v207, 0.0012755102
  %v536 = vmul.f32 %v216, 0.0012755102
  %v537 = vmul.f32 %v225, 0.0012755102
  %v538 = vmul.f32 %v234, 0.0012755102
  %v539 = vmul.f32 %v243, 0.0012755102
  %v540 = vmul.f32 %v252, 0.0012755102
  %v541 = vmul.f32 %v261, 0.0012755102
  %v542 = vmul.f32 %v270, 0.0012755102
  %v543 = vmul.f32 %v391, 0.0012755102
  %v544 = vmul.f32 %v400, 0.0012755102
  %v545 = vmul.f32 %v409, 0.0012755102
  %v546 = vmul.f32 %v418, 0.0012755102
  %v547 = vmul.f32 %v427, 0.0012755102
  %v548 = vmul.f32 %v436, 0.0012755102
  %v549 = vmul.f32 %v445, 0.0012755102
  %v550 = vmul.f32 %v454, 0.0012755102
  %v551 = vmul.f32 %v463, 0.0012755102
  %v552 = vmul.f32 %v472, 0.0012755102
  %v553 = vmul.f32 %v481, 0.0012755102
  %v554 = vmul.f32 %v490, 0.0012755102
  %v555 = vmul.f32 %v499, 0.0012755102
  %v556 = vmul.f32 %v508, 0.0012755102
  %v557 = vmul.f32 %v517, 0.0012755102
  %v558 = vmul.f32 %v526, 0.0012755102
  %v559 = vmul.f32 %v527, %v527
  %v560 = vmul.f32 %v528, %v528
  %v561 = vmul.f32 %v529, %v529
  %v562 = vmul.f32 %v530, %v530
  %v563 = vmul.f32 %v531, %v531
  %v564 = vmul.f32 %v532, %v532
  %v565 = vmul.f32 %v533, %v533
  %v566 = vmul.f32 %v534, %v534
  %v567 = vmul.f32 %v535, %v535
  %v568 = vmul.f32 %v536, %v536
  %v569 = vmul.f32 %v537, %v537
  %v570 = vmul.f32 %v538, %v538
  %v571 = vmul.f32 %v539, %v539
  %v572 = vmul.f32 %v540, %v540
  %v573 = vmul.f32 %v541, %v541
  %v574 = vmul.f32 %v542, %v542
  %v575 = vsub.f32 %v543, %v559
  %v576 = vsub.f32 %v544, %v560
  %v577 = vsub.f32 %v545, %v561
  %v578 = vsub.f32 %v546, %v562
  %v579 = vsub.f32 %v547, %v563
  %v580 = vsub.f32 %v548, %v564
  %v581 = vsub.f32 %v549, %v565
  %v582 = vsub.f32 %v550, %v566
  %v583 = vsub.f32 %v551, %v567
  %v584 = vsub.f32 %v552, %v568
  %v585 = vsub.f32 %v553, %v569
  %v586 = vsub.f32 %v554, %v570
  %v587 = vsub.f32 %v555, %v571
  %v588 = vsub.f32 %v556, %v572
  %v589 = vsub.f32 %v557, %v573
  %v590 = vsub.f32 %v558, %v574
  %v591 = vmax.f32 %v575, 0.0
  %v592 = vmax.f32 %v576, 0.0
  %v593 = vmax.f32 %v577, 0.0
  %v594 = vmax.f32 %v578, 0.0
  %v595 = vmax.f32 %v579, 0.0
  %v596 = vmax.f32 %v580, 0.0
  %v597 = vmax.f32 %v581, 0.0
  %v598 = vmax.f32 %v582, 0.0
  %v599 = vmax.f32 %v583, 0.0
  %v600 = vmax.f32 %v584, 0.0
  %v601 = vmax.f32 %v585, 0.0
  %v602 = vmax.f32 %v586, 0.0
  %v603 = vmax.f32 %v587, 0.0
  %v604 = vmax.f32 %v588, 0.0
  %v605 = vmax.f32 %v589, 0.0
  %v606 = vmax.f32 %v590, 0.0
  %v607 = vadd.f32 %v591, 1e-05
  %v608 = vadd.f32 %v592, 1e-05
  %v609 = vadd.f32 %v593, 1e-05
  %v610 = vadd.f32 %v594, 1e-05
  %v611 = vadd.f32 %v595, 1e-05
  %v612 = vadd.f32 %v596, 1e-05
  %v613 = vadd.f32 %v597, 1e-05
  %v614 = vadd.f32 %v598, 1e-05
  %v615 = vadd.f32 %v599, 1e-05
  %v616 = vadd.f32 %v600, 1e-05
  %v617 = vadd.f32 %v601, 1e-05
  %v618 = vadd.f32 %v602, 1e-05
  %v619 = vadd.f32 %v603, 1e-05
  %v620 = vadd.f32 %v604, 1e-05
  %v621 = vadd.f32 %v605, 1e-05
  %v622 = vadd.f32 %v606, 1e-05
  %v623 = vrsqrt.pop %v607
  %v624 = vrsqrt.pop %v608
  %v625 = vrsqrt.pop %v609
  %v626 = vrsqrt.pop %v610
  %v627 = vrsqrt.pop %v611
  %v628 = vrsqrt.pop %v612
  %v629 = vrsqrt.pop %v613
  %v630 = vrsqrt.pop %v614
  %v631 = vrsqrt.pop %v615
  %v632 = vrsqrt.pop %v616
  %v633 = vrsqrt.pop %v617
  %v634 = vrsqrt.pop %v618
  %v635 = vrsqrt.pop %v619
  %v636 = vrsqrt.pop %v620
  %v637 = vrsqrt.pop %v621
  %v638 = vrsqrt.pop %v622
  %v639 = vld [vmem:[%s1] sm:$0xff]
  %v640 = vld [vmem:[%s1 + $0x8] sm:$0xff]
  %v641 = vld [vmem:[%s1 + $0x10] sm:$0xff]
  %v642 = vld [vmem:[%s1 + $0x18] sm:$0xff]
  %v643 = vld [vmem:[%s1 + $0x20] sm:$0xff]
  %v644 = vld [vmem:[%s1 + $0x28] sm:$0xff]
  %v645 = vld [vmem:[%s1 + $0x30] sm:$0xff]
  %v646 = vld [vmem:[%s1 + $0x38] sm:$0xff]
  %v647 = vld [vmem:[%s1 + $0x40] sm:$0xff]
  %v648 = vld [vmem:[%s1 + $0x48] sm:$0xff]
  %v649 = vld [vmem:[%s1 + $0x50] sm:$0xff]
  %v650 = vld [vmem:[%s1 + $0x58] sm:$0xff]
  %v651 = vld [vmem:[%s1 + $0x60] sm:$0xff]
  %v652 = vld [vmem:[%s1 + $0x68] sm:$0xff]
  %v653 = vld [vmem:[%s1 + $0x70] sm:$0xff]
  %v654 = vld [vmem:[%s1 + $0x78] sm:$0xff]
  %v655 = vmul.f32 %v639, %v623
  %v656 = vmul.f32 %v640, %v624
  %v657 = vmul.f32 %v641, %v625
  %v658 = vmul.f32 %v642, %v626
  %v659 = vmul.f32 %v643, %v627
  %v660 = vmul.f32 %v644, %v628
  %v661 = vmul.f32 %v645, %v629
  %v662 = vmul.f32 %v646, %v630
  %v663 = vmul.f32 %v647, %v631
  %v664 = vmul.f32 %v648, %v632
  %v665 = vmul.f32 %v649, %v633
  %v666 = vmul.f32 %v650, %v634
  %v667 = vmul.f32 %v651, %v635
  %v668 = vmul.f32 %v652, %v636
  %v669 = vmul.f32 %v653, %v637
  %v670 = vmul.f32 %v654, %v638
  %v671 = vld [vmem:[%s2] sm:$0xff]
  %v672 = vld [vmem:[%s2 + $0x8] sm:$0xff]
  %v673 = vld [vmem:[%s2 + $0x10] sm:$0xff]
  %v674 = vld [vmem:[%s2 + $0x18] sm:$0xff]
  %v675 = vld [vmem:[%s2 + $0x20] sm:$0xff]
  %v676 = vld [vmem:[%s2 + $0x28] sm:$0xff]
  %v677 = vld [vmem:[%s2 + $0x30] sm:$0xff]
  %v678 = vld [vmem:[%s2 + $0x38] sm:$0xff]
  %v679 = vld [vmem:[%s2 + $0x40] sm:$0xff]
  %v680 = vld [vmem:[%s2 + $0x48] sm:$0xff]
  %v681 = vld [vmem:[%s2 + $0x50] sm:$0xff]
  %v682 = vld [vmem:[%s2 + $0x58] sm:$0xff]
  %v683 = vld [vmem:[%s2 + $0x60] sm:$0xff]
  %v684 = vld [vmem:[%s2 + $0x68] sm:$0xff]
  %v685 = vld [vmem:[%s2 + $0x70] sm:$0xff]
  %v686 = vld [vmem:[%s2 + $0x78] sm:$0xff]
  %v687 = vmul.f32 %v527, %v655
  %v688 = vmul.f32 %v528, %v656
  %v689 = vmul.f32 %v529, %v657
  %v690 = vmul.f32 %v530, %v658
  %v691 = vmul.f32 %v531, %v659
  %v692 = vmul.f32 %v532, %v660
  %v693 = vmul.f32 %v533, %v661
  %v694 = vmul.f32 %v534, %v662
  %v695 = vmul.f32 %v535, %v663
  %v696 = vmul.f32 %v536, %v664
  %v697 = vmul.f32 %v537, %v665
  %v698 = vmul.f32 %v538, %v666
  %v699 = vmul.f32 %v539, %v667
  %v700 = vmul.f32 %v540, %v668
  %v701 = vmul.f32 %v541, %v669
  %v702 = vmul.f32 %v542, %v670
  %v703 = vsub.f32 %v671, %v687
  %v704 = vsub.f32 %v672, %v688
  %v705 = vsub.f32 %v673, %v689
  %v706 = vsub.f32 %v674, %v690
  %v707 = vsub.f32 %v675, %v691
  %v708 = vsub.f32 %v676, %v692
  %v709 = vsub.f32 %v677, %v693
  %v710 = vsub.f32 %v678, %v694
  %v711 = vsub.f32 %v679, %v695
  %v712 = vsub.f32 %v680, %v696
  %v713 = vsub.f32 %v681, %v697
  %v714 = vsub.f32 %v682, %v698
  %v715 = vsub.f32 %v683, %v699
  %v716 = vsub.f32 %v684, %v700
  %v717 = vsub.f32 %v685, %v701
  %v718 = vsub.f32 %v686, %v702
  %720 = vset.pattern.permute.xlu0 0
  %721 = vperm.xlu0 %720, %v655
  %v722 = vpop.permute.xlu0 %721
  %725 = vset.pattern.permute.xlu0 0
  %726 = vperm.xlu0 %725, %v656
  %v727 = vpop.permute.xlu0 %726
  %730 = vset.pattern.permute.xlu0 0
  %731 = vperm.xlu0 %730, %v657
  %v732 = vpop.permute.xlu0 %731
  %735 = vset.pattern.permute.xlu0 0
  %736 = vperm.xlu0 %735, %v658
  %v737 = vpop.permute.xlu0 %736
  %740 = vset.pattern.permute.xlu0 0
  %741 = vperm.xlu0 %740, %v659
  %v742 = vpop.permute.xlu0 %741
  %745 = vset.pattern.permute.xlu0 0
  %746 = vperm.xlu0 %745, %v660
  %v747 = vpop.permute.xlu0 %746
  %750 = vset.pattern.permute.xlu0 0
  %751 = vperm.xlu0 %750, %v661
  %v752 = vpop.permute.xlu0 %751
  %755 = vset.pattern.permute.xlu0 0
  %756 = vperm.xlu0 %755, %v662
  %v757 = vpop.permute.xlu0 %756
  %760 = vset.pattern.permute.xlu0 0
  %761 = vperm.xlu0 %760, %v663
  %v762 = vpop.permute.xlu0 %761
  %765 = vset.pattern.permute.xlu0 0
  %766 = vperm.xlu0 %765, %v664
  %v767 = vpop.permute.xlu0 %766
  %770 = vset.pattern.permute.xlu0 0
  %771 = vperm.xlu0 %770, %v665
  %v772 = vpop.permute.xlu0 %771
  %775 = vset.pattern.permute.xlu0 0
  %776 = vperm.xlu0 %775, %v666
  %v777 = vpop.permute.xlu0 %776
  %780 = vset.pattern.permute.xlu0 0
  %781 = vperm.xlu0 %780, %v667
  %v782 = vpop.permute.xlu0 %781
  %785 = vset.pattern.permute.xlu0 0
  %786 = vperm.xlu0 %785, %v668
  %v787 = vpop.permute.xlu0 %786
  %790 = vset.pattern.permute.xlu0 0
  %791 = vperm.xlu0 %790, %v669
  %v792 = vpop.permute.xlu0 %791
  %795 = vset.pattern.permute.xlu0 0
  %796 = vperm.xlu0 %795, %v670
  %v797 = vpop.permute.xlu0 %796
  %v799 = vmul.f32 %v14, %v722
  %v800 = vmul.f32 %v15, %v722
  %v801 = vmul.f32 %v16, %v722
  %v802 = vmul.f32 %v17, %v722
  %v803 = vmul.f32 %v18, %v722
  %v804 = vmul.f32 %v19, %v722
  %v805 = vmul.f32 %v20, %v722
  %v806 = vmul.f32 %v21, %v727
  %v807 = vmul.f32 %v22, %v727
  %v808 = vmul.f32 %v23, %v727
  %v809 = vmul.f32 %v24, %v727
  %v810 = vmul.f32 %v25, %v727
  %v811 = vmul.f32 %v26, %v727
  %v812 = vmul.f32 %v27, %v727
  %v813 = vmul.f32 %v28, %v732
  %v814 = vmul.f32 %v29, %v732
  %v815 = vmul.f32 %v30, %v732
  %v816 = vmul.f32 %v31, %v732
  %v817 = vmul.f32 %v32, %v732
  %v818 = vmul.f32 %v33, %v732
  %v819 = vmul.f32 %v34, %v732
  %v820 = vmul.f32 %v35, %v737
  %v821 = vmul.f32 %v36, %v737
  %v822 = vmul.f32 %v37, %v737
  %v823 = vmul.f32 %v38, %v737
  %v824 = vmul.f32 %v39, %v737
  %v825 = vmul.f32 %v40, %v737
  %v826 = vmul.f32 %v41, %v737
  %v827 = vmul.f32 %v42, %v742
  %v828 = vmul.f32 %v43, %v742
  %v829 = vmul.f32 %v44, %v742
  %v830 = vmul.f32 %v45, %v742
  %v831 = vmul.f32 %v46, %v742
  %v832 = vmul.f32 %v47, %v742
  %v833 = vmul.f32 %v48, %v742
  %v834 = vmul.f32 %v49, %v747
  %v835 = vmul.f32 %v50, %v747
  %v836 = vmul.f32 %v51, %v747
  %v837 = vmul.f32 %v52, %v747
  %v838 = vmul.f32 %v53, %v747
  %v839 = vmul.f32 %v54, %v747
  %v840 = vmul.f32 %v55, %v747
  %v841 = vmul.f32 %v56, %v752
  %v842 = vmul.f32 %v57, %v752
  %v843 = vmul.f32 %v58, %v752
  %v844 = vmul.f32 %v59, %v752
  %v845 = vmul.f32 %v60, %v752
  %v846 = vmul.f32 %v61, %v752
  %v847 = vmul.f32 %v62, %v752
  %v848 = vmul.f32 %v63, %v757
  %v849 = vmul.f32 %v64, %v757
  %v850 = vmul.f32 %v65, %v757
  %v851 = vmul.f32 %v66, %v757
  %v852 = vmul.f32 %v67, %v757
  %v853 = vmul.f32 %v68, %v757
  %v854 = vmul.f32 %v69, %v757
  %v855 = vmul.f32 %v70, %v762
  %v856 = vmul.f32 %v71, %v762
  %v857 = vmul.f32 %v72, %v762
  %v858 = vmul.f32 %v73, %v762
  %v859 = vmul.f32 %v74, %v762
  %v860 = vmul.f32 %v75, %v762
  %v861 = vmul.f32 %v76, %v762
  %v862 = vmul.f32 %v77, %v767
  %v863 = vmul.f32 %v78, %v767
  %v864 = vmul.f32 %v79, %v767
  %v865 = vmul.f32 %v80, %v767
  %v866 = vmul.f32 %v81, %v767
  %v867 = vmul.f32 %v82, %v767
  %v868 = vmul.f32 %v83, %v767
  %v869 = vmul.f32 %v84, %v772
  %v870 = vmul.f32 %v85, %v772
  %v871 = vmul.f32 %v86, %v772
  %v872 = vmul.f32 %v87, %v772
  %v873 = vmul.f32 %v88, %v772
  %v874 = vmul.f32 %v89, %v772
  %v875 = vmul.f32 %v90, %v772
  %v876 = vmul.f32 %v91, %v777
  %v877 = vmul.f32 %v92, %v777
  %v878 = vmul.f32 %v93, %v777
  %v879 = vmul.f32 %v94, %v777
  %v880 = vmul.f32 %v95, %v777
  %v881 = vmul.f32 %v96, %v777
  %v882 = vmul.f32 %v97, %v777
  %v883 = vmul.f32 %v98, %v782
  %v884 = vmul.f32 %v99, %v782
  %v885 = vmul.f32 %v100, %v782
  %v886 = vmul.f32 %v101, %v782
  %v887 = vmul.f32 %v102, %v782
  %v888 = vmul.f32 %v103, %v782
  %v889 = vmul.f32 %v104, %v782
  %v890 = vmul.f32 %v105, %v787
  %v891 = vmul.f32 %v106, %v787
  %v892 = vmul.f32 %v107, %v787
  %v893 = vmul.f32 %v108, %v787
  %v894 = vmul.f32 %v109, %v787
  %v895 = vmul.f32 %v110, %v787
  %v896 = vmul.f32 %v111, %v787
  %v897 = vmul.f32 %v112, %v792
  %v898 = vmul.f32 %v113, %v792
  %v899 = vmul.f32 %v114, %v792
  %v900 = vmul.f32 %v115, %v792
  %v901 = vmul.f32 %v116, %v792
  %v902 = vmul.f32 %v117, %v792
  %v903 = vmul.f32 %v118, %v792
  %v904 = vmul.f32 %v119, %v797
  %v905 = vmul.f32 %v120, %v797
  %v906 = vmul.f32 %v121, %v797
  %v907 = vmul.f32 %v122, %v797
  %v908 = vmul.f32 %v123, %v797
  %v909 = vmul.f32 %v124, %v797
  %v910 = vmul.f32 %v125, %v797
  %912 = vset.pattern.permute.xlu0 0
  %913 = vperm.xlu0 %912, %v703
  %v914 = vpop.permute.xlu0 %913
  %917 = vset.pattern.permute.xlu0 0
  %918 = vperm.xlu0 %917, %v704
  %v919 = vpop.permute.xlu0 %918
  %922 = vset.pattern.permute.xlu0 0
  %923 = vperm.xlu0 %922, %v705
  %v924 = vpop.permute.xlu0 %923
  %927 = vset.pattern.permute.xlu0 0
  %928 = vperm.xlu0 %927, %v706
  %v929 = vpop.permute.xlu0 %928
  %932 = vset.pattern.permute.xlu0 0
  %933 = vperm.xlu0 %932, %v707
  %v934 = vpop.permute.xlu0 %933
  %937 = vset.pattern.permute.xlu0 0
  %938 = vperm.xlu0 %937, %v708
  %v939 = vpop.permute.xlu0 %938
  %942 = vset.pattern.permute.xlu0 0
  %943 = vperm.xlu0 %942, %v709
  %v944 = vpop.permute.xlu0 %943
  %947 = vset.pattern.permute.xlu0 0
  %948 = vperm.xlu0 %947, %v710
  %v949 = vpop.permute.xlu0 %948
  %952 = vset.pattern.permute.xlu0 0
  %953 = vperm.xlu0 %952, %v711
  %v954 = vpop.permute.xlu0 %953
  %957 = vset.pattern.permute.xlu0 0
  %958 = vperm.xlu0 %957, %v712
  %v959 = vpop.permute.xlu0 %958
  %962 = vset.pattern.permute.xlu0 0
  %963 = vperm.xlu0 %962, %v713
  %v964 = vpop.permute.xlu0 %963
  %967 = vset.pattern.permute.xlu0 0
  %968 = vperm.xlu0 %967, %v714
  %v969 = vpop.permute.xlu0 %968
  %972 = vset.pattern.permute.xlu0 0
  %973 = vperm.xlu0 %972, %v715
  %v974 = vpop.permute.xlu0 %973
  %977 = vset.pattern.permute.xlu0 0
  %978 = vperm.xlu0 %977, %v716
  %v979 = vpop.permute.xlu0 %978
  %982 = vset.pattern.permute.xlu0 0
  %983 = vperm.xlu0 %982, %v717
  %v984 = vpop.permute.xlu0 %983
  %987 = vset.pattern.permute.xlu0 0
  %988 = vperm.xlu0 %987, %v718
  %v989 = vpop.permute.xlu0 %988
  %v991 = vadd.f32 %v799, %v914
  %v992 = vadd.f32 %v800, %v914
  %v993 = vadd.f32 %v801, %v914
  %v994 = vadd.f32 %v802, %v914
  %v995 = vadd.f32 %v803, %v914
  %v996 = vadd.f32 %v804, %v914
  %v997 = vadd.f32 %v805, %v914
  %v998 = vadd.f32 %v806, %v919
  %v999 = vadd.f32 %v807, %v919
  %v1000 = vadd.f32 %v808, %v919
  %v1001 = vadd.f32 %v809, %v919
  %v1002 = vadd.f32 %v810, %v919
  %v1003 = vadd.f32 %v811, %v919
  %v1004 = vadd.f32 %v812, %v919
  %v1005 = vadd.f32 %v813, %v924
  %v1006 = vadd.f32 %v814, %v924
  %v1007 = vadd.f32 %v815, %v924
  %v1008 = vadd.f32 %v816, %v924
  %v1009 = vadd.f32 %v817, %v924
  %v1010 = vadd.f32 %v818, %v924
  %v1011 = vadd.f32 %v819, %v924
  %v1012 = vadd.f32 %v820, %v929
  %v1013 = vadd.f32 %v821, %v929
  %v1014 = vadd.f32 %v822, %v929
  %v1015 = vadd.f32 %v823, %v929
  %v1016 = vadd.f32 %v824, %v929
  %v1017 = vadd.f32 %v825, %v929
  %v1018 = vadd.f32 %v826, %v929
  %v1019 = vadd.f32 %v827, %v934
  %v1020 = vadd.f32 %v828, %v934
  %v1021 = vadd.f32 %v829, %v934
  %v1022 = vadd.f32 %v830, %v934
  %v1023 = vadd.f32 %v831, %v934
  %v1024 = vadd.f32 %v832, %v934
  %v1025 = vadd.f32 %v833, %v934
  %v1026 = vadd.f32 %v834, %v939
  %v1027 = vadd.f32 %v835, %v939
  %v1028 = vadd.f32 %v836, %v939
  %v1029 = vadd.f32 %v837, %v939
  %v1030 = vadd.f32 %v838, %v939
  %v1031 = vadd.f32 %v839, %v939
  %v1032 = vadd.f32 %v840, %v939
  %v1033 = vadd.f32 %v841, %v944
  %v1034 = vadd.f32 %v842, %v944
  %v1035 = vadd.f32 %v843, %v944
  %v1036 = vadd.f32 %v844, %v944
  %v1037 = vadd.f32 %v845, %v944
  %v1038 = vadd.f32 %v846, %v944
  %v1039 = vadd.f32 %v847, %v944
  %v1040 = vadd.f32 %v848, %v949
  %v1041 = vadd.f32 %v849, %v949
  %v1042 = vadd.f32 %v850, %v949
  %v1043 = vadd.f32 %v851, %v949
  %v1044 = vadd.f32 %v852, %v949
  %v1045 = vadd.f32 %v853, %v949
  %v1046 = vadd.f32 %v854, %v949
  %v1047 = vadd.f32 %v855, %v954
  %v1048 = vadd.f32 %v856, %v954
  %v1049 = vadd.f32 %v857, %v954
  %v1050 = vadd.f32 %v858, %v954
  %v1051 = vadd.f32 %v859, %v954
  %v1052 = vadd.f32 %v860, %v954
  %v1053 = vadd.f32 %v861, %v954
  %v1054 = vadd.f32 %v862, %v959
  %v1055 = vadd.f32 %v863, %v959
  %v1056 = vadd.f32 %v864, %v959
  %v1057 = vadd.f32 %v865, %v959
  %v1058 = vadd.f32 %v866, %v959
  %v1059 = vadd.f32 %v867, %v959
  %v1060 = vadd.f32 %v868, %v959
  %v1061 = vadd.f32 %v869, %v964
  %v1062 = vadd.f32 %v870, %v964
  %v1063 = vadd.f32 %v871, %v964
  %v1064 = vadd.f32 %v872, %v964
  %v1065 = vadd.f32 %v873, %v964
  %v1066 = vadd.f32 %v874, %v964
  %v1067 = vadd.f32 %v875, %v964
  %v1068 = vadd.f32 %v876, %v969
  %v1069 = vadd.f32 %v877, %v969
  %v1070 = vadd.f32 %v878, %v969
  %v1071 = vadd.f32 %v879, %v969
  %v1072 = vadd.f32 %v880, %v969
  %v1073 = vadd.f32 %v881, %v969
  %v1074 = vadd.f32 %v882, %v969
  %v1075 = vadd.f32 %v883, %v974
  %v1076 = vadd.f32 %v884, %v974
  %v1077 = vadd.f32 %v885, %v974
  %v1078 = vadd.f32 %v886, %v974
  %v1079 = vadd.f32 %v887, %v974
  %v1080 = vadd.f32 %v888, %v974
  %v1081 = vadd.f32 %v889, %v974
  %v1082 = vadd.f32 %v890, %v979
  %v1083 = vadd.f32 %v891, %v979
  %v1084 = vadd.f32 %v892, %v979
  %v1085 = vadd.f32 %v893, %v979
  %v1086 = vadd.f32 %v894, %v979
  %v1087 = vadd.f32 %v895, %v979
  %v1088 = vadd.f32 %v896, %v979
  %v1089 = vadd.f32 %v897, %v984
  %v1090 = vadd.f32 %v898, %v984
  %v1091 = vadd.f32 %v899, %v984
  %v1092 = vadd.f32 %v900, %v984
  %v1093 = vadd.f32 %v901, %v984
  %v1094 = vadd.f32 %v902, %v984
  %v1095 = vadd.f32 %v903, %v984
  %v1096 = vadd.f32 %v904, %v989
  %v1097 = vadd.f32 %v905, %v989
  %v1098 = vadd.f32 %v906, %v989
  %v1099 = vadd.f32 %v907, %v989
  %v1100 = vadd.f32 %v908, %v989
  %v1101 = vadd.f32 %v909, %v989
  %v1102 = vadd.f32 %v910, %v989
  %v1103 = vmax.f32 %v991, 0.0
  %v1104 = vmax.f32 %v992, 0.0
  %v1105 = vmax.f32 %v993, 0.0
  %v1106 = vmax.f32 %v994, 0.0
  %v1107 = vmax.f32 %v995, 0.0
  %v1108 = vmax.f32 %v996, 0.0
  %v1109 = vmax.f32 %v997, 0.0
  %v1110 = vmax.f32 %v998, 0.0
  %v1111 = vmax.f32 %v999, 0.0
  %v1112 = vmax.f32 %v1000, 0.0
  %v1113 = vmax.f32 %v1001, 0.0
  %v1114 = vmax.f32 %v1002, 0.0
  %v1115 = vmax.f32 %v1003, 0.0
  %v1116 = vmax.f32 %v1004, 0.0
  %v1117 = vmax.f32 %v1005, 0.0
  %v1118 = vmax.f32 %v1006, 0.0
  %v1119 = vmax.f32 %v1007, 0.0
  %v1120 = vmax.f32 %v1008, 0.0
  %v1121 = vmax.f32 %v1009, 0.0
  %v1122 = vmax.f32 %v1010, 0.0
  %v1123 = vmax.f32 %v1011, 0.0
  %v1124 = vmax.f32 %v1012, 0.0
  %v1125 = vmax.f32 %v1013, 0.0
  %v1126 = vmax.f32 %v1014, 0.0
  %v1127 = vmax.f32 %v1015, 0.0
  %v1128 = vmax.f32 %v1016, 0.0
  %v1129 = vmax.f32 %v1017, 0.0
  %v1130 = vmax.f32 %v1018, 0.0
  %v1131 = vmax.f32 %v1019, 0.0
  %v1132 = vmax.f32 %v1020, 0.0
  %v1133 = vmax.f32 %v1021, 0.0
  %v1134 = vmax.f32 %v1022, 0.0
  %v1135 = vmax.f32 %v1023, 0.0
  %v1136 = vmax.f32 %v1024, 0.0
  %v1137 = vmax.f32 %v1025, 0.0
  %v1138 = vmax.f32 %v1026, 0.0
  %v1139 = vmax.f32 %v1027, 0.0
  %v1140 = vmax.f32 %v1028, 0.0
  %v1141 = vmax.f32 %v1029, 0.0
  %v1142 = vmax.f32 %v1030, 0.0
  %v1143 = vmax.f32 %v1031, 0.0
  %v1144 = vmax.f32 %v1032, 0.0
  %v1145 = vmax.f32 %v1033, 0.0
  %v1146 = vmax.f32 %v1034, 0.0
  %v1147 = vmax.f32 %v1035, 0.0
  %v1148 = vmax.f32 %v1036, 0.0
  %v1149 = vmax.f32 %v1037, 0.0
  %v1150 = vmax.f32 %v1038, 0.0
  %v1151 = vmax.f32 %v1039, 0.0
  %v1152 = vmax.f32 %v1040, 0.0
  %v1153 = vmax.f32 %v1041, 0.0
  %v1154 = vmax.f32 %v1042, 0.0
  %v1155 = vmax.f32 %v1043, 0.0
  %v1156 = vmax.f32 %v1044, 0.0
  %v1157 = vmax.f32 %v1045, 0.0
  %v1158 = vmax.f32 %v1046, 0.0
  %v1159 = vmax.f32 %v1047, 0.0
  %v1160 = vmax.f32 %v1048, 0.0
  %v1161 = vmax.f32 %v1049, 0.0
  %v1162 = vmax.f32 %v1050, 0.0
  %v1163 = vmax.f32 %v1051, 0.0
  %v1164 = vmax.f32 %v1052, 0.0
  %v1165 = vmax.f32 %v1053, 0.0
  %v1166 = vmax.f32 %v1054, 0.0
  %v1167 = vmax.f32 %v1055, 0.0
  %v1168 = vmax.f32 %v1056, 0.0
  %v1169 = vmax.f32 %v1057, 0.0
  %v1170 = vmax.f32 %v1058, 0.0
  %v1171 = vmax.f32 %v1059, 0.0
  %v1172 = vmax.f32 %v1060, 0.0
  %v1173 = vmax.f32 %v1061, 0.0
  %v1174 = vmax.f32 %v1062, 0.0
  %v1175 = vmax.f32 %v1063, 0.0
  %v1176 = vmax.f32 %v1064, 0.0
  %v1177 = vmax.f32 %v1065, 0.0
  %v1178 = vmax.f32 %v1066, 0.0
  %v1179 = vmax.f32 %v1067, 0.0
  %v1180 = vmax.f32 %v1068, 0.0
  %v1181 = vmax.f32 %v1069, 0.0
  %v1182 = vmax.f32 %v1070, 0.0
  %v1183 = vmax.f32 %v1071, 0.0
  %v1184 = vmax.f32 %v1072, 0.0
  %v1185 = vmax.f32 %v1073, 0.0
  %v1186 = vmax.f32 %v1074, 0.0
  %v1187 = vmax.f32 %v1075, 0.0
  %v1188 = vmax.f32 %v1076, 0.0
  %v1189 = vmax.f32 %v1077, 0.0
  %v1190 = vmax.f32 %v1078, 0.0
  %v1191 = vmax.f32 %v1079, 0.0
  %v1192 = vmax.f32 %v1080, 0.0
  %v1193 = vmax.f32 %v1081, 0.0
  %v1194 = vmax.f32 %v1082, 0.0
  %v1195 = vmax.f32 %v1083, 0.0
  %v1196 = vmax.f32 %v1084, 0.0
  %v1197 = vmax.f32 %v1085, 0.0
  %v1198 = vmax.f32 %v1086, 0.0
  %v1199 = vmax.f32 %v1087, 0.0
  %v1200 = vmax.f32 %v1088, 0.0
  %v1201 = vmax.f32 %v1089, 0.0
  %v1202 = vmax.f32 %v1090, 0.0
  %v1203 = vmax.f32 %v1091, 0.0
  %v1204 = vmax.f32 %v1092, 0.0
  %v1205 = vmax.f32 %v1093, 0.0
  %v1206 = vmax.f32 %v1094, 0.0
  %v1207 = vmax.f32 %v1095, 0.0
  %v1208 = vmax.f32 %v1096, 0.0
  %v1209 = vmax.f32 %v1097, 0.0
  %v1210 = vmax.f32 %v1098, 0.0
  %v1211 = vmax.f32 %v1099, 0.0
  %v1212 = vmax.f32 %v1100, 0.0
  %v1213 = vmax.f32 %v1101, 0.0
  %v1214 = vmax.f32 %v1102, 0.0
  %1215 = vst [vmem:[%s3] sm:$0xff] %v1103
  %1216 = vst [vmem:[%s3 + $0x8] sm:$0xff] %v1104
  %1217 = vst [vmem:[%s3 + $0x10] sm:$0xff] %v1105
  %1218 = vst [vmem:[%s3 + $0x18] sm:$0xff] %v1106
  %1219 = vst [vmem:[%s3 + $0x20] sm:$0xff] %v1107
  %1220 = vst [vmem:[%s3 + $0x28] sm:$0xff] %v1108
  %1221 = vst.msk [vmem:[%s3 + $0x30] sm:$0xff] %vm131, %v1109
  %1222 = vst [vmem:[%s3 + $0x38] sm:$0xff] %v1110
  %1223 = vst [vmem:[%s3 + $0x40] sm:$0xff] %v1111
  %1224 = vst [vmem:[%s3 + $0x48] sm:$0xff] %v1112
  %1225 = vst [vmem:[%s3 + $0x50] sm:$0xff] %v1113
  %1226 = vst [vmem:[%s3 + $0x58] sm:$0xff] %v1114
  %1227 = vst [vmem:[%s3 + $0x60] sm:$0xff] %v1115
  %1228 = vst.msk [vmem:[%s3 + $0x68] sm:$0xff] %vm131, %v1116
  %1229 = vst [vmem:[%s3 + $0x70] sm:$0xff] %v1117
  %1230 = vst [vmem:[%s3 + $0x78] sm:$0xff] %v1118
  %1231 = vst [vmem:[%s3 + $0x80] sm:$0xff] %v1119
  %1232 = vst [vmem:[%s3 + $0x88] sm:$0xff] %v1120
  %1233 = vst [vmem:[%s3 + $0x90] sm:$0xff] %v1121
  %1234 = vst [vmem:[%s3 + $0x98] sm:$0xff] %v1122
  %1235 = vst.msk [vmem:[%s3 + $0xa0] sm:$0xff] %vm131, %v1123
  %1236 = vst [vmem:[%s3 + $0xa8] sm:$0xff] %v1124
  %1237 = vst [vmem:[%s3 + $0xb0] sm:$0xff] %v1125
  %1238 = vst [vmem:[%s3 + $0xb8] sm:$0xff] %v1126
  %1239 = vst [vmem:[%s3 + $0xc0] sm:$0xff] %v1127
  %1240 = vst [vmem:[%s3 + $0xc8] sm:$0xff] %v1128
  %1241 = vst [vmem:[%s3 + $0xd0] sm:$0xff] %v1129
  %1242 = vst.msk [vmem:[%s3 + $0xd8] sm:$0xff] %vm131, %v1130
  %1243 = vst [vmem:[%s3 + $0xe0] sm:$0xff] %v1131
  %1244 = vst [vmem:[%s3 + $0xe8] sm:$0xff] %v1132
  %1245 = vst [vmem:[%s3 + $0xf0] sm:$0xff] %v1133
  %1246 = vst [vmem:[%s3 + $0xf8] sm:$0xff] %v1134
  %1247 = vst [vmem:[%s3 + $0x100] sm:$0xff] %v1135
  %1248 = vst [vmem:[%s3 + $0x108] sm:$0xff] %v1136
  %1249 = vst.msk [vmem:[%s3 + $0x110] sm:$0xff] %vm131, %v1137
  %1250 = vst [vmem:[%s3 + $0x118] sm:$0xff] %v1138
  %1251 = vst [vmem:[%s3 + $0x120] sm:$0xff] %v1139
  %1252 = vst [vmem:[%s3 + $0x128] sm:$0xff] %v1140
  %1253 = vst [vmem:[%s3 + $0x130] sm:$0xff] %v1141
  %1254 = vst [vmem:[%s3 + $0x138] sm:$0xff] %v1142
  %1255 = vst [vmem:[%s3 + $0x140] sm:$0xff] %v1143
  %1256 = vst.msk [vmem:[%s3 + $0x148] sm:$0xff] %vm131, %v1144
  %1257 = vst [vmem:[%s3 + $0x150] sm:$0xff] %v1145
  %1258 = vst [vmem:[%s3 + $0x158] sm:$0xff] %v1146
  %1259 = vst [vmem:[%s3 + $0x160] sm:$0xff] %v1147
  %1260 = vst [vmem:[%s3 + $0x168] sm:$0xff] %v1148
  %1261 = vst [vmem:[%s3 + $0x170] sm:$0xff] %v1149
  %1262 = vst [vmem:[%s3 + $0x178] sm:$0xff] %v1150
  %1263 = vst.msk [vmem:[%s3 + $0x180] sm:$0xff] %vm131, %v1151
  %1264 = vst [vmem:[%s3 + $0x188] sm:$0xff] %v1152
  %1265 = vst [vmem:[%s3 + $0x190] sm:$0xff] %v1153
  %1266 = vst [vmem:[%s3 + $0x198] sm:$0xff] %v1154
  %1267 = vst [vmem:[%s3 + $0x1a0] sm:$0xff] %v1155
  %1268 = vst [vmem:[%s3 + $0x1a8] sm:$0xff] %v1156
  %1269 = vst [vmem:[%s3 + $0x1b0] sm:$0xff] %v1157
  %1270 = vst.msk [vmem:[%s3 + $0x1b8] sm:$0xff] %vm131, %v1158
  %1271 = vst [vmem:[%s3 + $0x1c0] sm:$0xff] %v1159
  %1272 = vst [vmem:[%s3 + $0x1c8] sm:$0xff] %v1160
  %1273 = vst [vmem:[%s3 + $0x1d0] sm:$0xff] %v1161
  %1274 = vst [vmem:[%s3 + $0x1d8] sm:$0xff] %v1162
  %1275 = vst [vmem:[%s3 + $0x1e0] sm:$0xff] %v1163
  %1276 = vst [vmem:[%s3 + $0x1e8] sm:$0xff] %v1164
  %1277 = vst.msk [vmem:[%s3 + $0x1f0] sm:$0xff] %vm131, %v1165
  %1278 = vst [vmem:[%s3 + $0x1f8] sm:$0xff] %v1166
  %1279 = vst [vmem:[%s3 + $0x200] sm:$0xff] %v1167
  %1280 = vst [vmem:[%s3 + $0x208] sm:$0xff] %v1168
  %1281 = vst [vmem:[%s3 + $0x210] sm:$0xff] %v1169
  %1282 = vst [vmem:[%s3 + $0x218] sm:$0xff] %v1170
  %1283 = vst [vmem:[%s3 + $0x220] sm:$0xff] %v1171
  %1284 = vst.msk [vmem:[%s3 + $0x228] sm:$0xff] %vm131, %v1172
  %1285 = vst [vmem:[%s3 + $0x230] sm:$0xff] %v1173
  %1286 = vst [vmem:[%s3 + $0x238] sm:$0xff] %v1174
  %1287 = vst [vmem:[%s3 + $0x240] sm:$0xff] %v1175
  %1288 = vst [vmem:[%s3 + $0x248] sm:$0xff] %v1176
  %1289 = vst [vmem:[%s3 + $0x250] sm:$0xff] %v1177
  %1290 = vst [vmem:[%s3 + $0x258] sm:$0xff] %v1178
  %1291 = vst.msk [vmem:[%s3 + $0x260] sm:$0xff] %vm131, %v1179
  %1292 = vst [vmem:[%s3 + $0x268] sm:$0xff] %v1180
  %1293 = vst [vmem:[%s3 + $0x270] sm:$0xff] %v1181
  %1294 = vst [vmem:[%s3 + $0x278] sm:$0xff] %v1182
  %1295 = vst [vmem:[%s3 + $0x280] sm:$0xff] %v1183
  %1296 = vst [vmem:[%s3 + $0x288] sm:$0xff] %v1184
  %1297 = vst [vmem:[%s3 + $0x290] sm:$0xff] %v1185
  %1298 = vst.msk [vmem:[%s3 + $0x298] sm:$0xff] %vm131, %v1186
  %1299 = vst [vmem:[%s3 + $0x2a0] sm:$0xff] %v1187
  %1300 = vst [vmem:[%s3 + $0x2a8] sm:$0xff] %v1188
  %1301 = vst [vmem:[%s3 + $0x2b0] sm:$0xff] %v1189
  %1302 = vst [vmem:[%s3 + $0x2b8] sm:$0xff] %v1190
  %1303 = vst [vmem:[%s3 + $0x2c0] sm:$0xff] %v1191
  %1304 = vst [vmem:[%s3 + $0x2c8] sm:$0xff] %v1192
  %1305 = vst.msk [vmem:[%s3 + $0x2d0] sm:$0xff] %vm131, %v1193
  %1306 = vst [vmem:[%s3 + $0x2d8] sm:$0xff] %v1194
  %1307 = vst [vmem:[%s3 + $0x2e0] sm:$0xff] %v1195
  %1308 = vst [vmem:[%s3 + $0x2e8] sm:$0xff] %v1196
  %1309 = vst [vmem:[%s3 + $0x2f0] sm:$0xff] %v1197
  %1310 = vst [vmem:[%s3 + $0x2f8] sm:$0xff] %v1198
  %1311 = vst [vmem:[%s3 + $0x300] sm:$0xff] %v1199
  %1312 = vst.msk [vmem:[%s3 + $0x308] sm:$0xff] %vm131, %v1200
  %1313 = vst [vmem:[%s3 + $0x310] sm:$0xff] %v1201
  %1314 = vst [vmem:[%s3 + $0x318] sm:$0xff] %v1202
  %1315 = vst [vmem:[%s3 + $0x320] sm:$0xff] %v1203
  %1316 = vst [vmem:[%s3 + $0x328] sm:$0xff] %v1204
  %1317 = vst [vmem:[%s3 + $0x330] sm:$0xff] %v1205
  %1318 = vst [vmem:[%s3 + $0x338] sm:$0xff] %v1206
  %1319 = vst.msk [vmem:[%s3 + $0x340] sm:$0xff] %vm131, %v1207
  %1320 = vst [vmem:[%s3 + $0x348] sm:$0xff] %v1208
  %1321 = vst [vmem:[%s3 + $0x350] sm:$0xff] %v1209
  %1322 = vst [vmem:[%s3 + $0x358] sm:$0xff] %v1210
  %1323 = vst [vmem:[%s3 + $0x360] sm:$0xff] %v1211
  %1324 = vst [vmem:[%s3 + $0x368] sm:$0xff] %v1212
  %1325 = vst [vmem:[%s3 + $0x370] sm:$0xff] %v1213
  %1326 = vst.msk [vmem:[%s3 + $0x378] sm:$0xff] %vm131, %v1214
  // Predicated region
  $region14: #{tpu_custom_call.1} parent=0 // pred_check
    _
  $region15: #{tpu_custom_call.1} parent=0 // pred_check_branch
    %1328 = sbr.rel (0) target = $region17
  $region16: #{tpu_custom_call.1} parent=0 // pred_region
    _
  $region17: #{tpu_custom_call.1} parent=0 // pred_fallthru
    _
  // Predicated region
  $region18: #{tpu_custom_call.1} parent=0 // pred_check
    _
  $region19: #{tpu_custom_call.1} parent=0 // pred_check_branch
    %1330 = sbr.rel (0) target = $region21
  $region20: #{tpu_custom_call.1} parent=0 // pred_region
    _
  $region21: #{tpu_custom_call.1} parent=0 // pred_fallthru
    _

</llo_original>
